<compile_context>
chip_gen: v5e
topology: v5e:2x2
jax: 0.10.0
libtpu: 0.0.40
codegen_flags: <defaults>
</compile_context>

<pallas_src>
import numpy as np
import jax
import jax.numpy as jnp
from jax.experimental import pallas as pl
from jax.experimental.pallas import tpu as pltpu

LANE = 128  # TPU lane width: flattened element axis is kept lane-dense.


def _round_up(x, m):
    return ((x + m - 1) // m) * m


def _sublane_multiple(*dtypes):
    # f32 -> 8 sublanes, bf16/f16 -> 16, int8/fp8 -> 32 (packed-layout granularity).
    min_itemsize = min(jnp.dtype(d).itemsize for d in dtypes)
    return 8 * max(1, 4 // int(min_itemsize))


def _plan_tiles(rows, block_rows, sub):
    """Pick a row-tile size (multiple of `sub`) and grid length for (rows, LANE)."""
    if rows <= sub:
        return rows, 1                       # single full-extent block
    tr = min(_round_up(block_rows, sub), _round_up(rows, sub))
    # v7x megacore: keep >= 2 grid steps when everything would fit in one tile.
    if tr >= rows and rows > 2 * sub:
        tr = _round_up(pl.cdiv(rows, 2), sub)
    return tr, pl.cdiv(rows, tr)


def _prepare(predictions, targets, block_rows):
    """Flatten to a lane-dense (rows, LANE) layout with the minimal padding."""
    out_dtype = jnp.promote_types(predictions.dtype, targets.dtype)
    total = int(np.prod(predictions.shape)) if predictions.shape else 1

    p = predictions.reshape(-1)
    t = targets.reshape(-1)

    rows = pl.cdiv(total, LANE)
    pad = rows * LANE - total
    if pad:
        # <= 127 elements; only ragged flat lengths pay this (tiny) copy.
        p = jnp.pad(p, (0, pad))
        t = jnp.pad(t, (0, pad))
    p2 = p.reshape(rows, LANE)
    t2 = t.reshape(rows, LANE)

    sub = _sublane_multiple(p.dtype, t.dtype, out_dtype)
    tr, grid = _plan_tiles(rows, block_rows, sub)

    io_itemsize = (jnp.dtype(p.dtype).itemsize + jnp.dtype(t.dtype).itemsize
                   + jnp.dtype(out_dtype).itemsize)
    vmem_limit = int(min(max(3 * tr * LANE * io_itemsize + (4 << 20), 32 << 20),
                         64 << 20))
    cost = pl.CostEstimate(flops=3 * total, transcendentals=0,
                           bytes_accessed=total * io_itemsize)
    return p2, t2, out_dtype, total, rows, pad, tr, grid, vmem_limit, cost


def _masked_mse_kernel(p_ref, t_ref, o_ref):
    p = p_ref[...]
    t = t_ref[...]
    dt = o_ref.dtype
    diff = p.astype(dt) - t.astype(dt)
    loss = diff * diff
    # mask = ~((p == 0) & (t == 0)); one vselect instead of bool->float + vmul.
    o_ref[...] = jnp.where((p != 0) | (t != 0), loss, 0.0).astype(dt)


def masked_mse_loss_elementwise(predictions, targets, *, block_rows=4096):
    """Element-wise masked MSE: ((p - t)^2) * ~((p==0)&(t==0)), same shape as inputs."""
    if predictions.shape != targets.shape:
        raise ValueError("predictions and targets must have the same shape")
    orig_shape = predictions.shape
    out_dtype = jnp.promote_types(predictions.dtype, targets.dtype)
    total = int(np.prod(orig_shape)) if orig_shape else 1
    if total == 0:
        return jnp.zeros(orig_shape, out_dtype)

    (p2, t2, out_dtype, total, rows, pad, tr, grid,
     vmem_limit, cost) = _prepare(predictions, targets, block_rows)

    spec = pl.BlockSpec((tr, LANE), lambda i: (i, 0))
    out = pl.pallas_call(
        _masked_mse_kernel,
        out_shape=jax.ShapeDtypeStruct((rows, LANE), out_dtype),
        grid_spec=pltpu.PrefetchScalarGridSpec(
            num_scalar_prefetch=0,
            grid=(grid,),
            in_specs=[spec, spec],
            out_specs=spec,
        ),
        compiler_params=pltpu.CompilerParams(
            dimension_semantics=("parallel",),   # v7x: row tiles split across the 2 TCs
            vmem_limit_bytes=vmem_limit,
        ),
        cost_estimate=cost,
    )(p2, t2)

    if pad:
        return out.reshape(-1)[:total].reshape(orig_shape)
    return out.reshape(orig_shape)            # zero-copy fast path


def _make_masked_mse_sum_kernel(rows, tr):
    """Fused elementwise-masked-MSE + sum reduction (accumulator output)."""
    def kernel(p_ref, t_ref, sum_ref):
        i = pl.program_id(0)

        @pl.when(i == 0)
        def _():
            sum_ref[...] = jnp.zeros_like(sum_ref)

        p = p_ref[...]
        t = t_ref[...]
        pf = p.astype(jnp.float32)
        tf = t.astype(jnp.float32)
        diff = pf - tf
        loss = jnp.where((p != 0) | (t != 0), diff * diff, 0.0)
        if rows % tr != 0:
            # Partial last tile: exclude rows past the end of the array.
            row_ids = jax.lax.broadcasted_iota(jnp.int32, loss.shape, 0) + i * tr
            loss = jnp.where(row_ids < rows, loss, 0.0)
        sum_ref[...] = sum_ref[...] + jnp.sum(loss)

    return kernel


def masked_mse_loss(predictions, targets, *, block_rows=4096):
    """MaskedMSELoss (scalar mean) with the sum reduction fused into the kernel."""
    if predictions.shape != targets.shape:
        raise ValueError("predictions and targets must have the same shape")
    out_dtype = jnp.promote_types(predictions.dtype, targets.dtype)
    total = int(np.prod(predictions.shape)) if predictions.shape else 1
    if total == 0:
        return jnp.array(jnp.nan, out_dtype)   # matches torch.mean on empty input

    (p2, t2, out_dtype, total, rows, _pad, tr, grid,
     vmem_limit, cost) = _prepare(predictions, targets, block_rows)

    spec = pl.BlockSpec((tr, LANE), lambda i: (i, 0))
    total_sum = pl.pallas_call(
        _make_masked_mse_sum_kernel(rows, tr),
        out_shape=jax.ShapeDtypeStruct((1, 1), jnp.float32),
        grid_spec=pltpu.PrefetchScalarGridSpec(
            num_scalar_prefetch=0,
            grid=(grid,),
            in_specs=[spec, spec],
            out_specs=pl.BlockSpec((1, 1), lambda i: (0, 0)),   # resident accumulator
        ),
        compiler_params=pltpu.CompilerParams(
            dimension_semantics=("arbitrary",),  # accumulating output -> sequential
            vmem_limit_bytes=vmem_limit,
        ),
        cost_estimate=cost,
    )(p2, t2)

    return (total_sum[0, 0] / total).astype(out_dtype)


def reference(predictions, targets):
    """Pure-JAX reference reproducing the PyTorch forward pass."""
    loss = (predictions - targets) ** 2
    mask = jnp.logical_not(jnp.logical_and(predictions == 0, targets == 0))
    return loss * mask.astype(loss.dtype)


if __name__ == "__main__":
    B, C, H, W = 2, 4, 16, 16
    key = jax.random.PRNGKey(0)
    kp, kt, km = jax.random.split(key, 3)

    preds = jax.random.normal(kp, (B, C, H, W), jnp.float32)
    targs = jax.random.normal(kt, (B, C, H, W), jnp.float32)

    # Zero some matching positions so the (pred==0 & tgt==0) mask actually fires,
    # and zero a few predictions only (those must NOT be masked).
    both_zero = jax.random.bernoulli(km, 0.3, (B, C, H, W))
    preds = jnp.where(both_zero, 0.0, preds)
    targs = jnp.where(both_zero, 0.0, targs)
    preds = preds.at[0, 0, 0, :4].set(0.0)

    # Element-wise kernel (the MaskedMSELoss_element_wise forward).
    out = jax.block_until_ready(jax.jit(masked_mse_loss_elementwise)(preds, targs))
    ref = reference(preds, targs)
    np.testing.assert_allclose(np.asarray(out), np.asarray(ref), rtol=1e-6, atol=1e-6)

    # Ragged shape exercises the (tiny) pad path + partial-block handling.
    rp = jax.random.normal(kp, (3, 5, 7), jnp.float32)
    rt = jax.random.normal(kt, (3, 5, 7), jnp.float32)
    rz = jax.random.bernoulli(km, 0.3, (3, 5, 7))
    rp = jnp.where(rz, 0.0, rp)
    rt = jnp.where(rz, 0.0, rt)
    out_r = jax.block_until_ready(jax.jit(masked_mse_loss_elementwise)(rp, rt))
    np.testing.assert_allclose(np.asarray(out_r), np.asarray(reference(rp, rt)),
                               rtol=1e-6, atol=1e-6)

    # Fused-reduction scalar MaskedMSELoss variant.
    mean_out = jax.block_until_ready(jax.jit(masked_mse_loss)(preds, targs))
    np.testing.assert_allclose(np.asarray(mean_out), np.asarray(jnp.mean(ref)),
                               rtol=1e-5, atol=1e-6)

    print("KERNEL_OK")
</pallas_src>

<mosaic_0001>
module attributes {stable_mosaic.version = 11 : i64} {
  func.func @_masked_mse_kernel(%arg0: i32, %arg1: memref<16x128xf32, #tpu.memory_space<vmem>>, %arg2: memref<16x128xf32, #tpu.memory_space<vmem>>, %arg3: memref<16x128xf32, #tpu.memory_space<vmem>>) attributes {dimension_semantics = [#tpu.dimension_semantics<parallel>], iteration_bounds = array<i64: 1>, scalar_prefetch = 0 : i64, scratch_operands = 0 : i64, tpu.core_type = #tpu.core_type<tc>, window_params = [{transform_indices = @transform_0, window_bounds = array<i64: 16, 128>}, {transform_indices = @transform_1, window_bounds = array<i64: 16, 128>}, {transform_indices = @transform_2, window_bounds = array<i64: 16, 128>}]} {
    %c0 = arith.constant 0 : index
    %c0_0 = arith.constant 0 : index
    %0 = vector.load %arg1[%c0, %c0_0] : memref<16x128xf32, #tpu.memory_space<vmem>>, vector<16x128xf32>
    %c0_1 = arith.constant 0 : index
    %c0_2 = arith.constant 0 : index
    %1 = vector.load %arg2[%c0_1, %c0_2] : memref<16x128xf32, #tpu.memory_space<vmem>>, vector<16x128xf32>
    %2 = arith.subf %0, %1 : vector<16x128xf32>
    %3 = arith.mulf %2, %2 : vector<16x128xf32>
    %cst = arith.constant 0.000000e+00 : f32
    %4 = vector.broadcast %cst : f32 to vector<16x128xf32>
    %5 = arith.cmpf one, %0, %4 : vector<16x128xf32>
    %cst_3 = arith.constant 0.000000e+00 : f32
    %6 = vector.broadcast %cst_3 : f32 to vector<16x128xf32>
    %7 = arith.cmpf one, %1, %6 : vector<16x128xf32>
    %8 = arith.ori %5, %7 : vector<16x128xi1>
    %cst_4 = arith.constant 0.000000e+00 : f32
    %9 = vector.broadcast %cst_4 : f32 to vector<16x128xf32>
    %10 = arith.select %8, %3, %9 : vector<16x128xi1>, vector<16x128xf32>
    %c0_5 = arith.constant 0 : index
    %c0_6 = arith.constant 0 : index
    %11 = vector.load %arg3[%c0_5, %c0_6] : memref<16x128xf32, #tpu.memory_space<vmem>>, vector<16x128xf32>
    tpu.vector_store %arg3[%c0_5, %c0_6], %10 {strides = array<i32>} : memref<16x128xf32, #tpu.memory_space<vmem>>, vector<16x128xf32>,
    return
  }
  func.func @transform_0(%arg0: i32) -> (i32, i32) {
    %c0_i32 = arith.constant 0 : i32
    %c0_i32_0 = arith.constant 0 : i32
    return %arg0, %c0_i32 : i32, i32
  }
  func.func @transform_1(%arg0: i32) -> (i32, i32) {
    %c0_i32 = arith.constant 0 : i32
    %c0_i32_0 = arith.constant 0 : i32
    return %arg0, %c0_i32 : i32, i32
  }
  func.func @transform_2(%arg0: i32) -> (i32, i32) {
    %c0_i32 = arith.constant 0 : i32
    %c0_i32_0 = arith.constant 0 : i32
    return %arg0, %c0_i32 : i32, i32
  }
}

</mosaic_0001>

<llo_original>
// kernel: masked_mse_loss_elementwise.1
$region0: #{masked_mse_loss_elementwise.1}
  #allocation0 [shape = 'u32[]', space=smem, size = 0x4, offset = 0x4, fixed_abs, tag = 'smem constant byte address 0x4 - core index']
  #allocation1 [shape = 'u32[72,128]{1,0:T(1,128)}', space=vmem, size = 0x9000, scoped, tag = 'internal scratch']
  %s0 = inlined_call_operand.vmem [shape: f32[16,128], index: 0, kind: input, shape index: {}]
  %s1 = inlined_call_operand.vmem [shape: f32[16,128], index: 1, kind: input, shape index: {}]
  %s2 = inlined_call_operand.vmem [shape: f32[16,128], index: 2, kind: output, shape index: {}]
  %s3 = sld [smem:[#allocation0]]
  $region18: #{masked_mse_loss_elementwise.1} parent=0
    _
  %s5 = ssub.s32 1, %s3
  %s6 = scalar_select 0, %s5, %s3
  // Predicated region
  $region2: #{masked_mse_loss_elementwise.1} parent=0 // pred_check
    _
  $region3: #{masked_mse_loss_elementwise.1} parent=0 // pred_check_branch
    %8 = sbr.rel (0) target = $region5
  $region4: #{masked_mse_loss_elementwise.1} parent=0 // pred_region
    _
  $region5: #{masked_mse_loss_elementwise.1} parent=0 // pred_fallthru
    _
  // Predicated region
  $region6: #{masked_mse_loss_elementwise.1} parent=0 // pred_check
    _
  $region7: #{masked_mse_loss_elementwise.1} parent=0 // pred_check_branch
    %10 = sbr.rel (0) target = $region9
  $region8: #{masked_mse_loss_elementwise.1} parent=0 // pred_region
    _
  $region9: #{masked_mse_loss_elementwise.1} parent=0 // pred_fallthru
    _
  %v11 = vld [vmem:[%s0] sm:$0xff]
  %v12 = vld [vmem:[%s0 + $0x8] sm:$0xff]
  %v13 = vld [vmem:[%s1] sm:$0xff]
  %v14 = vld [vmem:[%s1 + $0x8] sm:$0xff]
  %v15 = vsub.f32 %v11, %v13
  %v16 = vsub.f32 %v12, %v14
  %v17 = vmul.f32 %v15, %v15
  %v18 = vmul.f32 %v16, %v16
  %vm19 = vcmp.ne.f32.partialorder %v11, 0.0
  %vm20 = vcmp.ne.f32.partialorder %v12, 0.0
  %vm21 = vcmp.ne.f32.partialorder %v13, 0.0
  %vm22 = vcmp.ne.f32.partialorder %v14, 0.0
  %vm23 = vmor %vm19, %vm21
  %vm24 = vmor %vm20, %vm22
  %v25 = vsel %vm23, %v17, 0.0
  %v26 = vsel %vm24, %v18, 0.0
  %27 = vst [vmem:[%s2] sm:$0xff] %v25
  %28 = vst [vmem:[%s2 + $0x8] sm:$0xff] %v26
  // Predicated region
  $region10: #{masked_mse_loss_elementwise.1} parent=0 // pred_check
    _
  $region11: #{masked_mse_loss_elementwise.1} parent=0 // pred_check_branch
    %30 = sbr.rel (0) target = $region13
  $region12: #{masked_mse_loss_elementwise.1} parent=0 // pred_region
    _
  $region13: #{masked_mse_loss_elementwise.1} parent=0 // pred_fallthru
    _
  // Predicated region
  $region14: #{masked_mse_loss_elementwise.1} parent=0 // pred_check
    _
  $region15: #{masked_mse_loss_elementwise.1} parent=0 // pred_check_branch
    %32 = sbr.rel (0) target = $region17
  $region16: #{masked_mse_loss_elementwise.1} parent=0 // pred_region
    _
  $region17: #{masked_mse_loss_elementwise.1} parent=0 // pred_fallthru
    _

</llo_original>
